<compile_context>
chip_gen: v7x
topology: tpu7x:2x2x1
jax: 0.10.0
libtpu: 0.0.40
codegen_flags: <defaults>
</compile_context>

<pallas_src>
import functools

import jax
import jax.numpy as jnp
from jax.experimental import pallas as pl
from jax.experimental.pallas import tpu as pltpu

LANE = 128
# Scoped-VMEM budget: safe on v7x (64 MiB physical) and leaves headroom on
# v5e/v6e (128 MiB).  Working sets below are sized to stay well under this.
_VMEM_LIMIT_BYTES = 48 * 1024 * 1024
# Keep H fully VMEM-resident in the aggregation kernel when one copy is at most
# this big (a double-buffered copy still fits the budget on every generation).
_H_RESIDENT_MAX_BYTES = 6 * 1024 * 1024


def _round_up(x, m):
    return ((x + m - 1) // m) * m


def _pick_tiles(n, tm_cap, tk_cap):
    """Pad N so the grid always tiles with lane-aligned, pipeline-friendly blocks."""
    tm_cap = max(LANE, (tm_cap // LANE) * LANE)
    tk_cap = max(LANE, (tk_cap // LANE) * LANE)
    base = 512 if n > 512 else LANE      # 512-aligned padding keeps >=512 tiles
    n_pad = _round_up(n, base)

    def fit(cap):
        t = min(cap, n_pad)
        while n_pad % t:                 # always terminates at a divisor >= base
            t -= LANE
        return t

    return n_pad, fit(tm_cap), fit(tk_cap)


# ---------------------------------------------------------------------------
# Kernel 1: per-node linear transforms  H = x @ W_l,  R = x @ W_r + b
# (single fused bf16 matmul against the stacked weight [f_in_pad, 2*f_out_pad])
# ---------------------------------------------------------------------------
def _transform_kernel(x_ref, w_ref, b_ref, h_ref, r_ref, *, f_out_pad):
    # bf16 x bf16 -> f32 accumulate on the MXU.
    xw = jnp.dot(x_ref[...], w_ref[...], preferred_element_type=jnp.float32)
    h_ref[...] = xw[:, :f_out_pad].astype(h_ref.dtype)    # neighbor term, bf16
    r_ref[...] = xw[:, f_out_pad:] + b_ref[...]            # root term + bias, f32


def sage_transform(x, w_cat, b, *, tm):
    n, f_in_pad = x.shape
    f_out_pad = b.shape[1]
    kernel = functools.partial(_transform_kernel, f_out_pad=f_out_pad)
    return pl.pallas_call(
        kernel,
        out_shape=(jax.ShapeDtypeStruct((n, f_out_pad), jnp.bfloat16),
                   jax.ShapeDtypeStruct((n, f_out_pad), jnp.float32)),
        grid=(n // tm,),
        in_specs=[
            pl.BlockSpec((tm, f_in_pad), lambda i: (i, 0)),
            pl.BlockSpec((f_in_pad, 2 * f_out_pad), lambda i: (0, 0)),
            pl.BlockSpec((1, f_out_pad), lambda i: (0, 0)),
        ],
        out_specs=(pl.BlockSpec((tm, f_out_pad), lambda i: (i, 0)),
                   pl.BlockSpec((tm, f_out_pad), lambda i: (i, 0))),
        compiler_params=pltpu.CompilerParams(
            dimension_semantics=("parallel",),
            vmem_limit_bytes=_VMEM_LIMIT_BYTES),
    )(x, w_cat, b)


# ---------------------------------------------------------------------------
# Kernel 2: tiled mean aggregation + epilogue:
#   out = (1/deg) * (Adj @ H) + R, row-wise L2 normalize, relu / log_softmax.
# ---------------------------------------------------------------------------
def _aggregate_kernel(a_ref, h_ref, r_ref, dinv_ref, out_ref, acc_ref, *,
                      tk, h_resident, valid_cols, apply_relu,
                      apply_log_softmax):
    k = pl.program_id(1)

    @pl.when(k == 0)
    def _():
        acc_ref[...] = jnp.zeros_like(acc_ref)

    # Adjacency streams from HBM as int8 (1 byte/entry); upcast in-registers so
    # the dot runs at the bf16 MXU rate.  Counts are exactly representable.
    a_tile = a_ref[...].astype(jnp.float32).astype(jnp.bfloat16)
    if h_resident:
        # H is a single VMEM-resident slab; slice the contraction chunk here.
        start = pl.multiple_of(k * tk, tk)
        h_tile = h_ref[pl.ds(start, tk), :]
    else:
        h_tile = h_ref[...]
    acc_ref[...] += jnp.dot(a_tile, h_tile, preferred_element_type=jnp.float32)

    @pl.when(k == pl.num_programs(1) - 1)
    def _():
        # Exact mean: the 1/deg row scale is applied in f32 here (Adj holds raw
        # edge counts), then the f32 root term is added.
        out = acc_ref[...] * dinv_ref[...] + r_ref[...]
        # F.normalize (L2, eps=1e-12): padded lanes are exactly zero, so the
        # sum of squares over the 128-lane slab equals the sum over valid cols.
        sumsq = jnp.sum(out * out, axis=-1, keepdims=True)
        out = out * jax.lax.rsqrt(jnp.maximum(sumsq, 1e-24))
        if apply_relu:
            out = jnp.maximum(out, 0.0)
        if apply_log_softmax:
            # log_softmax over the valid columns only; padded lanes are masked.
            lane = jax.lax.broadcasted_iota(jnp.int32, out.shape, 1)
            masked = jnp.where(lane < valid_cols, out, -1e30)
            m = jnp.max(masked, axis=-1, keepdims=True)
            s = masked - m
            denom = jnp.sum(jnp.exp(s), axis=-1, keepdims=True)
            out = s - jnp.log(denom)
        out_ref[...] = out.astype(out_ref.dtype)


def sage_aggregate(adj_i8, h, r, deg_inv, *, tm, tk, valid_cols, apply_relu,
                   apply_log_softmax, out_dtype):
    n = adj_i8.shape[0]
    f_pad = h.shape[1]
    h_resident = (h.size * 2) <= _H_RESIDENT_MAX_BYTES
    kernel = functools.partial(
        _aggregate_kernel, tk=tk, h_resident=h_resident, valid_cols=valid_cols,
        apply_relu=apply_relu, apply_log_softmax=apply_log_softmax)

    # Deeper pipelining on the dominant A stream; fall back gracefully if this
    # Pallas version lacks pipeline_mode / Buffered.
    try:
        a_spec = pl.BlockSpec((tm, tk), lambda i, k: (i, k),
                              pipeline_mode=pl.Buffered(3))
    except (TypeError, AttributeError):
        a_spec = pl.BlockSpec((tm, tk), lambda i, k: (i, k))

    if h_resident:
        # DMA'd once per layer (constant block index), sliced in-kernel.
        h_spec = pl.BlockSpec((n, f_pad), lambda i, k: (0, 0))
    else:
        h_spec = pl.BlockSpec((tk, f_pad), lambda i, k: (k, 0))

    return pl.pallas_call(
        kernel,
        out_shape=jax.ShapeDtypeStruct((n, f_pad), out_dtype),
        grid=(n // tm, n // tk),
        in_specs=[
            a_spec,                                           # adjacency (int8)
            h_spec,                                           # neighbor features
            pl.BlockSpec((tm, f_pad), lambda i, k: (i, 0)),   # root term (f32)
            pl.BlockSpec((tm, 1), lambda i, k: (i, 0)),       # 1/deg row scale
        ],
        out_specs=pl.BlockSpec((tm, f_pad), lambda i, k: (i, 0)),
        scratch_shapes=[pltpu.VMEM((tm, f_pad), jnp.float32)],
        compiler_params=pltpu.CompilerParams(
            dimension_semantics=("parallel", "arbitrary"),
            vmem_limit_bytes=_VMEM_LIMIT_BYTES),
    )(adj_i8, h, r, deg_inv)


# ---------------------------------------------------------------------------
# Graph / parameter plumbing (plain JAX, wrapper-side)
# ---------------------------------------------------------------------------
def build_adjacency(edge_index, n_pad):
    """Exact edge-count adjacency (int8) + f32 inverse in-degree, matching PyG
    scatter-mean over incoming edges: out_i = (1/deg_i) * sum_{j->i} x_j."""
    src = edge_index[0]
    dst = edge_index[1]
    counts = jnp.zeros((n_pad, n_pad), jnp.float32).at[dst, src].add(1.0)
    deg = jnp.sum(counts, axis=1, keepdims=True)
    deg_inv = 1.0 / jnp.maximum(deg, 1.0)
    # TODO(synk): int8 saturates if one (dst, src) pair repeats > 127 times.
    adj_i8 = counts.astype(jnp.int8)
    return adj_i8, deg_inv


def _pad_layer(w_l, w_r, b, f_in_pad, f_out_pad):
    d_in, d_out = w_l.shape
    wl = jnp.zeros((f_in_pad, f_out_pad), jnp.float32).at[:d_in, :d_out].set(w_l)
    wr = jnp.zeros((f_in_pad, f_out_pad), jnp.float32).at[:d_in, :d_out].set(w_r)
    w_cat = jnp.concatenate([wl, wr], axis=1).astype(jnp.bfloat16)
    b_pad = jnp.zeros((1, f_out_pad), jnp.float32).at[:, :d_out].set(
        b.reshape(1, -1))
    return w_cat, b_pad


def init_sage_params(key, in_dim, hidden_dim, num_layers):
    """Deterministic (synthetic) parameter init: each SAGEConv has (W_l, W_r, b)."""
    dims = [(in_dim, hidden_dim)] + [(hidden_dim, hidden_dim)] * (num_layers - 1)
    convs = []
    for d_in, d_out in dims:
        key, k1, k2 = jax.random.split(key, 3)
        scale = 1.0 / jnp.sqrt(jnp.float32(d_in))
        w_l = jax.random.normal(k1, (d_in, d_out), jnp.float32) * scale
        w_r = jax.random.normal(k2, (d_in, d_out), jnp.float32) * scale
        b = jnp.zeros((d_out,), jnp.float32)
        convs.append((w_l, w_r, b))
    key, k1, k2 = jax.random.split(key, 3)
    scale = 1.0 / jnp.sqrt(jnp.float32(hidden_dim))
    out_wl = jax.random.normal(k1, (hidden_dim, 2), jnp.float32) * scale
    out_wr = jax.random.normal(k2, (hidden_dim, 2), jnp.float32) * scale
    out_b = jnp.zeros((2,), jnp.float32)
    return {"convs": convs, "output": (out_wl, out_wr, out_b)}


def sage_forward(x, edge_index, params, *, loss="weighted",
                 tm_cap=512, tk_cap=2048):
    num_nodes, in_dim = x.shape
    n_pad, tm, tk = _pick_tiles(num_nodes, tm_cap, tk_cap)

    adj_i8, deg_inv = build_adjacency(edge_index, n_pad)

    # Lane-pad the node features once and run the whole activation/weight chain
    # in bf16 (halves activation HBM traffic, bf16 MXU rate); all accumulation
    # and the normalize / log_softmax epilogue stay f32 inside the kernels.
    f_in_pad = _round_up(in_dim, LANE)
    h = jnp.zeros((n_pad, f_in_pad), jnp.float32).at[:num_nodes, :in_dim].set(x)
    h = h.astype(jnp.bfloat16)

    layers = list(params["convs"]) + [params["output"]]
    for li, (w_l, w_r, b) in enumerate(layers):
        is_output = (li == len(layers) - 1)
        d_out = w_l.shape[1]
        f_out_pad = _round_up(d_out, LANE)
        w_cat, b_pad = _pad_layer(w_l, w_r, b, h.shape[1], f_out_pad)
        h_nb, r_root = sage_transform(h, w_cat, b_pad, tm=tm)
        h = sage_aggregate(
            adj_i8, h_nb, r_root, deg_inv, tm=tm, tk=tk, valid_cols=d_out,
            apply_relu=not is_output,
            apply_log_softmax=is_output and (loss != "focal"),
            out_dtype=jnp.float32 if is_output else jnp.bfloat16)

    d_out_final = params["output"][0].shape[1]
    return h[:num_nodes, :d_out_final]


if __name__ == "__main__":
    # Small synthetic graph: 256 nodes, 16 input features, hidden 32, 2 layers,
    # 2048 random edges.  tm=tk=128 so the demo exercises the real tiled /
    # accumulated (2x2) grid and the VMEM-resident-H slicing path.
    N, IN_DIM, HIDDEN, NUM_LAYERS, E = 256, 16, 32, 2, 2048

    key = jax.random.PRNGKey(0)
    key, kx, ke, kp = jax.random.split(key, 4)

    x = jax.random.normal(kx, (N, IN_DIM), jnp.float32)
    edge_index = jax.random.randint(ke, (2, E), 0, N, dtype=jnp.int32)

    params = init_sage_params(kp, IN_DIM, HIDDEN, NUM_LAYERS)

    out = sage_forward(x, edge_index, params, loss="weighted",
                       tm_cap=128, tk_cap=128)
    out = jax.block_until_ready(out)

    assert out.shape == (N, 2)
    # log_softmax sanity: each row's probabilities sum to 1.
    row_sums = jnp.sum(jnp.exp(out), axis=-1)
    assert bool(jnp.all(jnp.isfinite(out)))
    assert bool(jnp.allclose(row_sums, 1.0, atol=1e-3))
    print("KERNEL_OK")
</pallas_src>

<mosaic_0001>
module attributes {stable_mosaic.version = 11 : i64} {
  func.func @_transform_kernel(%arg0: i32, %arg1: memref<128x128xbf16, #tpu.memory_space<vmem>>, %arg2: memref<128x256xbf16, #tpu.memory_space<vmem>>, %arg3: memref<1x128xf32, #tpu.memory_space<vmem>>, %arg4: memref<128x128xbf16, #tpu.memory_space<vmem>>, %arg5: memref<128x128xf32, #tpu.memory_space<vmem>>) attributes {dimension_semantics = [#tpu.dimension_semantics<parallel>], iteration_bounds = array<i64: 2>, scalar_prefetch = 0 : i64, scratch_operands = 0 : i64, tpu.core_type = #tpu.core_type<tc>, window_params = [{transform_indices = @transform_0, window_bounds = array<i64: 128, 128>}, {pipeline_mode = #tpu.pipeline_mode<synchronous>, transform_indices = @transform_1, window_bounds = array<i64: 128, 256>}, {pipeline_mode = #tpu.pipeline_mode<synchronous>, transform_indices = @transform_2, window_bounds = array<i64: 1, 128>}, {transform_indices = @transform_3, window_bounds = array<i64: 128, 128>}, {transform_indices = @transform_4, window_bounds = array<i64: 128, 128>}]} {
    %c0 = arith.constant 0 : index
    %c0_0 = arith.constant 0 : index
    %0 = vector.load %arg1[%c0, %c0_0] : memref<128x128xbf16, #tpu.memory_space<vmem>>, vector<128x128xbf16>
    %c0_1 = arith.constant 0 : index
    %c0_2 = arith.constant 0 : index
    %1 = vector.load %arg2[%c0_1, %c0_2] : memref<128x256xbf16, #tpu.memory_space<vmem>>, vector<128x256xbf16>
    %cst = arith.constant dense<0.000000e+00> : vector<128x256xf32>
    %2 = tpu.matmul %0, %1, %cst {dimension_numbers = #tpu.dot_dimension_numbers<[1], [0], [0], [1], [0, 0, 1, 1], [], []>} : vector<128x128xbf16>, vector<128x256xbf16>, vector<128x256xf32> -> vector<128x256xf32>
    %3 = vector.extract_strided_slice %2 {offsets = [0, 0], sizes = [128, 128], strides = [1, 1]} : vector<128x256xf32> to vector<128x128xf32>
    %4 = arith.truncf %3 : vector<128x128xf32> to vector<128x128xbf16>
    %c0_3 = arith.constant 0 : index
    %c0_4 = arith.constant 0 : index
    %5 = vector.load %arg4[%c0_3, %c0_4] : memref<128x128xbf16, #tpu.memory_space<vmem>>, vector<128x128xbf16>
    tpu.vector_store %arg4[%c0_3, %c0_4], %4 {strides = array<i32>} : memref<128x128xbf16, #tpu.memory_space<vmem>>, vector<128x128xbf16>,
    %6 = vector.extract_strided_slice %2 {offsets = [0, 128], sizes = [128, 128], strides = [1, 1]} : vector<128x256xf32> to vector<128x128xf32>
    %c0_5 = arith.constant 0 : index
    %c0_6 = arith.constant 0 : index
    %7 = vector.load %arg3[%c0_5, %c0_6] : memref<1x128xf32, #tpu.memory_space<vmem>>, vector<1x128xf32>
    %8 = vector.broadcast %7 : vector<1x128xf32> to vector<128x128xf32>
    %9 = arith.addf %6, %8 : vector<128x128xf32>
    %c0_7 = arith.constant 0 : index
    %c0_8 = arith.constant 0 : index
    %10 = vector.load %arg5[%c0_7, %c0_8] : memref<128x128xf32, #tpu.memory_space<vmem>>, vector<128x128xf32>
    tpu.vector_store %arg5[%c0_7, %c0_8], %9 {strides = array<i32>} : memref<128x128xf32, #tpu.memory_space<vmem>>, vector<128x128xf32>,
    return
  }
  func.func @transform_0(%arg0: i32) -> (i32, i32) {
    %c0_i32 = arith.constant 0 : i32
    %c0_i32_0 = arith.constant 0 : i32
    return %arg0, %c0_i32 : i32, i32
  }
  func.func @transform_1(%arg0: i32) -> (i32, i32) {
    %c0_i32 = arith.constant 0 : i32
    %c0_i32_0 = arith.constant 0 : i32
    %c0_i32_1 = arith.constant 0 : i32
    return %c0_i32, %c0_i32_0 : i32, i32
  }
  func.func @transform_2(%arg0: i32) -> (i32, i32) {
    %c0_i32 = arith.constant 0 : i32
    %c0_i32_0 = arith.constant 0 : i32
    %c0_i32_1 = arith.constant 0 : i32
    return %c0_i32, %c0_i32_0 : i32, i32
  }
  func.func @transform_3(%arg0: i32) -> (i32, i32) {
    %c0_i32 = arith.constant 0 : i32
    %c0_i32_0 = arith.constant 0 : i32
    return %arg0, %c0_i32 : i32, i32
  }
  func.func @transform_4(%arg0: i32) -> (i32, i32) {
    %c0_i32 = arith.constant 0 : i32
    %c0_i32_0 = arith.constant 0 : i32
    return %arg0, %c0_i32 : i32, i32
  }
}

</mosaic_0001>

<llo_original>
// kernel: tpu_custom_call.1
$region0: #{tpu_custom_call.1}
  #allocation0 [shape = 'u32[]', space=smem, size = 0x4, offset = 0x4, fixed_abs, tag = 'smem constant byte address 0x4 - core index']
  #allocation1 [shape = 'u32[144,128]{1,0:T(1,128)}', space=vmem, size = 0x12000, scoped, tag = 'internal scratch']
  %s0 = inlined_call_operand.hbm [shape: bf16[256,128], index: 0, kind: input, shape index: {}]
  %s1 = inlined_call_operand.hbm [shape: bf16[128,256], index: 1, kind: input, shape index: {}]
  %s2 = inlined_call_operand.vmem [shape: f32[1,128], index: 2, kind: input, shape index: {}]
  %s3 = inlined_call_operand.hbm [shape: bf16[256,128], index: 3, kind: output, shape index: {0}]
  %s4 = inlined_call_operand.hbm [shape: f32[256,128], index: 4, kind: output, shape index: {1}]
  %5 = xla_tuple %s3, %s4
  %s6 = sld [smem:[#allocation0]]
  $region61: #{tpu_custom_call.1} parent=0
    _
  %s8 = ssub.s32 1, %s6
  %s9 = scalar_select 0, %s8, %s6
  $region1: #{tpu_custom_call.1} parent=0
    #allocation2 [shape = 'u8[65536]{0}', space=vmem, size = 0x10000, scoped, tag = 'input window, operand 0']
    #allocation3 [shape = 's32[2]{0}', space=sflag, size = 0x8, scoped, tag = 'scoped memory for tpu_custom_call.1']
    #allocation4 [shape = 's32[2]{0}', space=sflag, size = 0x8, scoped, tag = 'scoped memory for tpu_custom_call.1']
    #allocation5 [shape = 'u8[65536]{0}', space=vmem, size = 0x10000, scoped, tag = 'input window, operand 1, single buffered']
    #allocation6 [shape = 's32[1]{0}', space=sflag, size = 0x4, scoped, tag = 'scoped memory for tpu_custom_call.1']
    #allocation7 [shape = 'u8[65536]{0}', space=vmem, size = 0x10000, scoped, tag = 'output window, operand 0']
    #allocation8 [shape = 'u8[131072]{0}', space=vmem, size = 0x20000, scoped, tag = 'output window, operand 1']
    #allocation9 [shape = 's32[2]{0}', space=sflag, size = 0x8, scoped, tag = 'scoped memory for tpu_custom_call.1']
    %10 = vsyncpa [#allocation3], 0
    %s11 = scalar_lea.sflag [#allocation3], 1
    %12 = vsyncpa %s11, 0
    %13 = vsyncpa [#allocation6], 0
    %14 = vsyncpa [#allocation4], 0
    %s15 = scalar_lea.sflag [#allocation4], 1
    %16 = vsyncpa %s15, 0
    %17 = vsyncpa [#allocation9], 0
    %s18 = scalar_lea.sflag [#allocation9], 1
    %19 = vsyncpa %s18, 0
    loop: start=0, step=1, limit=4
    $region2: #{tpu_custom_call.1} parent=1 // loop_pre_header
      _
    $region3: #{tpu_custom_call.1} parent=1 // loop_header
      %s21 = sphi 0, %s25
      %p22 = scmp.ge.s32.totalorder %s21, 4
      %s31 = sphi 0, %s33
      %s34 = sphi 0, %s31
      %s35 = sphi 0, %s34
      %s51 = sphi 0, %s35
      %s55 = sphi 0, %s55
      %s57 = sphi 0, %s55
      %s58 = sphi 0, %s57
      %s72 = sphi 0, %s58
      %s76 = sphi 0, %s76
      %s78 = sphi 0, %s76
      %s79 = sphi 0, %s78
      %s93 = sphi 0, %s79
      %s99 = sphi 0, %s101
      %s102 = sphi 0, %s99
      %s103 = sphi 0, %s102
      %s119 = sphi 0, %s103
      %s125 = sphi 0, %s127
      %s128 = sphi 0, %s125
      %s129 = sphi 0, %s128
      %s145 = sphi 0, %s129
    $region4: #{tpu_custom_call.1} parent=1 // loop_header_branch
      %24 = sbr.rel (%p22) target = $region8
    $region5: #{tpu_custom_call.1} parent=1 // loop_body
      %s26 = ssub.s32 %s21, 1
      %s27 = ssub.s32 %s21, 2
      %s28 = sadd.s32 %s21, 1
      %s29 = ssub.s32 %s21, %s28
      %p30 = scmp.eq.s32.totalorder %s29, 0
      %s32 = sadd.s32 %s31, 1
      %s33 = scalar_select %p30, %s31, %s32
      %p36 = pneg %p30
      %p37 = scmp.eq.s32.totalorder %s21, 1
      %p38 = por %p36, %p37
      %p39 = scmp.ne.s32.totalorder %s31, %s34
      %p40 = scmp.eq.s32.totalorder %s21, 0
      %p41 = por %p39, %p40
      %p42 = scmp.ne.s32.totalorder %s31, %s34
      %p43 = scmp.eq.s32.totalorder %s26, 1
      %p44 = por %p42, %p43
      %p45 = scmp.ne.s32.totalorder %s34, %s35
      %p46 = scmp.eq.s32.totalorder %s26, 0
      %p47 = por %p45, %p46
      %p48 = scmp.ne.s32.totalorder %s34, %s35
      %p49 = scmp.eq.s32.totalorder %s27, 1
      %p50 = por %p48, %p49
      %p52 = scmp.ne.s32.totalorder %s35, %s51
      %p53 = scmp.eq.s32.totalorder %s27, 0
      %p54 = por %p52, %p53
      %s56 = sadd.s32 %s55, 1
      %p59 = scmp.eq.s32.totalorder %s21, 1
      %p60 = scmp.ne.s32.totalorder %s55, %s57
      %p61 = scmp.eq.s32.totalorder %s21, 0
      %p62 = por %p60, %p61
      %p63 = scmp.ne.s32.totalorder %s55, %s57
      %p64 = scmp.eq.s32.totalorder %s26, 1
      %p65 = por %p63, %p64
      %p66 = scmp.ne.s32.totalorder %s57, %s58
      %p67 = scmp.eq.s32.totalorder %s26, 0
      %p68 = por %p66, %p67
      %p69 = scmp.ne.s32.totalorder %s57, %s58
      %p70 = scmp.eq.s32.totalorder %s27, 1
      %p71 = por %p69, %p70
      %p73 = scmp.ne.s32.totalorder %s58, %s72
      %p74 = scmp.eq.s32.totalorder %s27, 0
      %p75 = por %p73, %p74
      %s77 = sadd.s32 %s76, 1
      %p80 = scmp.eq.s32.totalorder %s21, 1
      %p81 = scmp.ne.s32.totalorder %s76, %s78
      %p82 = scmp.eq.s32.totalorder %s21, 0
      %p83 = por %p81, %p82
      %p84 = scmp.ne.s32.totalorder %s76, %s78
      %p85 = scmp.eq.s32.totalorder %s26, 1
      %p86 = por %p84, %p85
      %p87 = scmp.ne.s32.totalorder %s78, %s79
      %p88 = scmp.eq.s32.totalorder %s26, 0
      %p89 = por %p87, %p88
      %p90 = scmp.ne.s32.totalorder %s78, %s79
      %p91 = scmp.eq.s32.totalorder %s27, 1
      %p92 = por %p90, %p91
      %p94 = scmp.ne.s32.totalorder %s79, %s93
      %p95 = scmp.eq.s32.totalorder %s27, 0
      %p96 = por %p94, %p95
      %s97 = ssub.s32 %s21, %s28
      %p98 = scmp.eq.s32.totalorder %s97, 0
      %s100 = sadd.s32 %s99, 1
      %s101 = scalar_select %p98, %s99, %s100
      %p104 = pneg %p98
      %p105 = scmp.eq.s32.totalorder %s21, 1
      %p106 = por %p104, %p105
      %p107 = scmp.ne.s32.totalorder %s99, %s102
      %p108 = scmp.eq.s32.totalorder %s21, 0
      %p109 = por %p107, %p108
      %p110 = scmp.ne.s32.totalorder %s99, %s102
      %p111 = scmp.eq.s32.totalorder %s26, 1
      %p112 = por %p110, %p111
      %p113 = scmp.ne.s32.totalorder %s102, %s103
      %p114 = scmp.eq.s32.totalorder %s26, 0
      %p115 = por %p113, %p114
      %p116 = scmp.ne.s32.totalorder %s102, %s103
      %p117 = scmp.eq.s32.totalorder %s27, 1
      %p118 = por %p116, %p117
      %p120 = scmp.ne.s32.totalorder %s103, %s119
      %p121 = scmp.eq.s32.totalorder %s27, 0
      %p122 = por %p120, %p121
      %s123 = ssub.s32 %s21, %s28
      %p124 = scmp.eq.s32.totalorder %s123, 0
      %s126 = sadd.s32 %s125, 1
      %s127 = scalar_select %p124, %s125, %s126
      %p130 = pneg %p124
      %p131 = scmp.eq.s32.totalorder %s21, 1
      %p132 = por %p130, %p131
      %p133 = scmp.ne.s32.totalorder %s125, %s128
      %p134 = scmp.eq.s32.totalorder %s21, 0
      %p135 = por %p133, %p134
      %p136 = scmp.ne.s32.totalorder %s125, %s128
      %p137 = scmp.eq.s32.totalorder %s26, 1
      %p138 = por %p136, %p137
      %p139 = scmp.ne.s32.totalorder %s128, %s129
      %p140 = scmp.eq.s32.totalorder %s26, 0
      %p141 = por %p139, %p140
      %p142 = scmp.ne.s32.totalorder %s128, %s129
      %p143 = scmp.eq.s32.totalorder %s27, 1
      %p144 = por %p142, %p143
      %p146 = scmp.ne.s32.totalorder %s129, %s145
      %p147 = scmp.eq.s32.totalorder %s27, 0
      %p148 = por %p146, %p147
      %p149 = scmp.le.s32.totalorder 1, %s21
      %p150 = scmp.lt.s32.totalorder %s21, 3
      %p151 = pnand %p149, %p150
      %p152 = pneg %p151
      // Predicated region
      $region9: #{tpu_custom_call.1} parent=5 // pred_check
        _
      $region10: #{tpu_custom_call.1} parent=5 // pred_check_branch
        %154 = sbr.rel (%p151) target = $region12
      $region11: #{tpu_custom_call.1} parent=5 // pred_region
        %s155 = ssub.s32 %s21, 1
        // Predicated region
        $region13: #{tpu_custom_call.1} parent=11 // pred_check
          %p156 = pneg %p68
        $region14: #{tpu_custom_call.1} parent=11 // pred_check_branch
          %158 = sbr.rel (%p156) target = $region16
        $region15: #{tpu_custom_call.1} parent=11 // pred_region
          %s160 = ssub.s32 2048, 2048
          %161 = vsyncadd [#allocation6], %s160
          %s162 = sshll.u32 [#allocation5], 4
          %s163 = int_to_ptr.vmem [resolvable:$true] %s162
          %168 = dma.hbm_to_vmem [thread:$0]  %s1, 2048, %s163, [#allocation6], 128, 128, 8
        $region16: #{tpu_custom_call.1} parent=11 // pred_fallthru
          _
        // Predicated region
        $region17: #{tpu_custom_call.1} parent=11 // pred_check
          %p169 = pneg %p89
        $region18: #{tpu_custom_call.1} parent=11 // pred_check_branch
          %171 = sbr.rel (%p169) target = $region20
        $region19: #{tpu_custom_call.1} parent=11 // pred_region
          _
        $region20: #{tpu_custom_call.1} parent=11 // pred_fallthru
          _
      $region12: #{tpu_custom_call.1} parent=5 // pred_fallthru
        _
      %p172 = scmp.lt.s32.totalorder %s21, 2
      // Predicated region
      $region21: #{tpu_custom_call.1} parent=5 // pred_check
        %p173 = pneg %p172
      $region22: #{tpu_custom_call.1} parent=5 // pred_check_branch
        %175 = sbr.rel (%p173) target = $region24
      $region23: #{tpu_custom_call.1} parent=5 // pred_region
        // Predicated region
        $region25: #{tpu_custom_call.1} parent=23 // pred_check
          %p176 = pneg %p41
        $region26: #{tpu_custom_call.1} parent=23 // pred_check_branch
          %178 = sbr.rel (%p176) target = $region28
        $region27: #{tpu_custom_call.1} parent=23 // pred_region
          %s179 = sand.u32 %s31, 1
          %s180 = scalar_lea.sflag [#allocation3], %s179
          %s181 = sand.u32 %s31, 1
          %s182 = smul.addr %s181, 64
          %s183 = scalar_lea.vmem [#allocation2], %s182
          %s184 = smul.u32 16, %s21
          %s186 = ssub.s32 1024, 1024
          %187 = vsyncadd %s180, %s186
          %s188 = smul.addr %s184, 64
          %s189 = scalar_lea.hbm %s0, %s188
          %s190 = sshll.u32 %s183, 4
          %s191 = int_to_ptr.vmem [resolvable:$true] %s190
          %196 = dma.hbm_to_vmem [thread:$0]  %s189, 1024, %s191, %s180, 64, 64, 4
        $region28: #{tpu_custom_call.1} parent=23 // pred_fallthru
          _
      $region24: #{tpu_custom_call.1} parent=5 // pred_fallthru
        _
      %p197 = scmp.le.s32.totalorder 1, %s21
      %p198 = scmp.lt.s32.totalorder %s21, 3
      %p199 = pnand %p197, %p198
      %p200 = pneg %p199
      // Predicated region
      $region29: #{tpu_custom_call.1} parent=5 // pred_check
        _
      $region30: #{tpu_custom_call.1} parent=5 // pred_check_branch
        %202 = sbr.rel (%p199) target = $region32
      $region31: #{tpu_custom_call.1} parent=5 // pred_region
        %s203 = ssub.s32 %s21, 1
        %s204 = sand.u32 %s34, 1
        %s205 = scalar_lea.sflag [#allocation3], %s204
        %s206 = sand.u32 %s34, 1
        %s207 = smul.addr %s206, 64
        %s208 = scalar_lea.vmem [#allocation2], %s207
        // Predicated region
        $region33: #{tpu_custom_call.1} parent=31 // pred_check
          %p209 = pneg %p47
        $region34: #{tpu_custom_call.1} parent=31 // pred_check_branch
          %211 = sbr.rel (%p209) target = $region36
        $region35: #{tpu_custom_call.1} parent=31 // pred_region
          %212 = dma.done %s205, 1024
        $region36: #{tpu_custom_call.1} parent=31 // pred_fallthru
          _
        // Predicated region
        $region37: #{tpu_custom_call.1} parent=31 // pred_check
          %p213 = pneg %p68
        $region38: #{tpu_custom_call.1} parent=31 // pred_check_branch
          %215 = sbr.rel (%p213) target = $region40
        $region39: #{tpu_custom_call.1} parent=31 // pred_region
          %216 = dma.done [#allocation6], 2048
        $region40: #{tpu_custom_call.1} parent=31 // pred_fallthru
          _
        %s217 = sand.u32 %s34, 1
        %s218 = scalar_lea.sflag [#allocation3], %s217
        %s219 = sand.u32 %s34, 1
        %s220 = smul.addr %s219, 64
        %s221 = scalar_lea.vmem [#allocation2], %s220
        %p222 = pneg %p47
        %p223 = pneg %p44
        %p224 = pneg %p68
        %p225 = pneg %p65
        %p226 = pneg %p89
        %p227 = pneg %p86
        %p228 = pneg %p115
        %p229 = pneg %p112
        %s230 = sand.u32 %s102, 1
        %s231 = scalar_lea.sflag [#allocation4], %s230
        %s232 = sand.u32 %s102, 1
        %s233 = smul.addr %s232, 64
        %s234 = scalar_lea.vmem [#allocation7], %s233
        %p235 = pneg %p141
        %p236 = pneg %p138
        %s237 = sand.u32 %s128, 1
        %s238 = scalar_lea.sflag [#allocation9], %s237
        %s239 = sand.u32 %s128, 1
        %s240 = smul.addr %s239, 128
        %s241 = scalar_lea.vmem [#allocation8], %s240
        %s242 = smul.u32 16, %s26
        %s243 = smul.u32 16, %s26
        %s244 = smul.u32 16, %s26
        %v246 = vld [vmem:[%s208] sm:$0xf]
        %v247 = vld [vmem:[%s208 + $0x4] sm:$0xf]
        %v248 = vld [vmem:[%s208 + $0x8] sm:$0xf]
        %v249 = vld [vmem:[%s208 + $0xc] sm:$0xf]
        %v250 = vld [vmem:[%s208 + $0x10] sm:$0xf]
        %v251 = vld [vmem:[%s208 + $0x14] sm:$0xf]
        %v252 = vld [vmem:[%s208 + $0x18] sm:$0xf]
        %v253 = vld [vmem:[%s208 + $0x1c] sm:$0xf]
        %v254 = vld [vmem:[%s208 + $0x20] sm:$0xf]
        %v255 = vld [vmem:[%s208 + $0x24] sm:$0xf]
        %v256 = vld [vmem:[%s208 + $0x28] sm:$0xf]
        %v257 = vld [vmem:[%s208 + $0x2c] sm:$0xf]
        %v258 = vld [vmem:[%s208 + $0x30] sm:$0xf]
        %v259 = vld [vmem:[%s208 + $0x34] sm:$0xf]
        %v260 = vld [vmem:[%s208 + $0x38] sm:$0xf]
        %v261 = vld [vmem:[%s208 + $0x3c] sm:$0xf]
        %v262 = vld [vmem:[#allocation5] sm:$0xff]
        %v263 = vld [vmem:[#allocation5 + $0x8] sm:$0xff]
        %v264 = vld [vmem:[#allocation5 + $0x10] sm:$0xff]
        %v265 = vld [vmem:[#allocation5 + $0x18] sm:$0xff]
        %v266 = vld [vmem:[#allocation5 + $0x20] sm:$0xff]
        %v267 = vld [vmem:[#allocation5 + $0x28] sm:$0xff]
        %v268 = vld [vmem:[#allocation5 + $0x30] sm:$0xff]
        %v269 = vld [vmem:[#allocation5 + $0x38] sm:$0xff]
        %v270 = vld [vmem:[#allocation5 + $0x40] sm:$0xff]
        %v271 = vld [vmem:[#allocation5 + $0x48] sm:$0xff]
        %v272 = vld [vmem:[#allocation5 + $0x50] sm:$0xff]
        %v273 = vld [vmem:[#allocation5 + $0x58] sm:$0xff]
        %v274 = vld [vmem:[#allocation5 + $0x60] sm:$0xff]
        %v275 = vld [vmem:[#allocation5 + $0x68] sm:$0xff]
        %v276 = vld [vmem:[#allocation5 + $0x70] sm:$0xff]
        %v277 = vld [vmem:[#allocation5 + $0x78] sm:$0xff]
        %v294 = vunpack.c.l.b16 %v246
        %v295 = vunpack.c.l.b16 %v247
        %v296 = vunpack.c.l.b16 %v248
        %v297 = vunpack.c.l.b16 %v249
        %v298 = vunpack.c.l.b16 %v250
        %v299 = vunpack.c.l.b16 %v251
        %v300 = vunpack.c.l.b16 %v252
        %v301 = vunpack.c.l.b16 %v253
        %v302 = vunpack.c.l.b16 %v254
        %v303 = vunpack.c.l.b16 %v255
        %v304 = vunpack.c.l.b16 %v256
        %v305 = vunpack.c.l.b16 %v257
        %v306 = vunpack.c.l.b16 %v258
        %v307 = vunpack.c.l.b16 %v259
        %v308 = vunpack.c.l.b16 %v260
        %v309 = vunpack.c.l.b16 %v261
        %v310 = vpack.c.b16 %v295, %v294
        %v311 = vpack.c.b16 %v297, %v296
        %v312 = vpack.c.b16 %v299, %v298
        %v313 = vpack.c.b16 %v301, %v300
        %v314 = vpack.c.b16 %v303, %v302
        %v315 = vpack.c.b16 %v305, %v304
        %v316 = vpack.c.b16 %v307, %v306
        %v317 = vpack.c.b16 %v309, %v308
        %v342 = vunpack.c.l.b16 %v262
        %v343 = vunpack.c.h.b16 %v262
        %v344 = vunpack.c.l.b16 %v263
        %v345 = vunpack.c.h.b16 %v263
        %v346 = vunpack.c.l.b16 %v264
        %v347 = vunpack.c.h.b16 %v264
        %v348 = vunpack.c.l.b16 %v265
        %v349 = vunpack.c.h.b16 %v265
        %v350 = vunpack.c.l.b16 %v266
        %v351 = vunpack.c.h.b16 %v266
        %v352 = vunpack.c.l.b16 %v267
        %v353 = vunpack.c.h.b16 %v267
        %v354 = vunpack.c.l.b16 %v268
        %v355 = vunpack.c.h.b16 %v268
        %v356 = vunpack.c.l.b16 %v269
        %v357 = vunpack.c.h.b16 %v269
        %v358 = vunpack.c.l.b16 %v270
        %v359 = vunpack.c.h.b16 %v270
        %v360 = vunpack.c.l.b16 %v271
        %v361 = vunpack.c.h.b16 %v271
        %v362 = vunpack.c.l.b16 %v272
        %v363 = vunpack.c.h.b16 %v272
        %v364 = vunpack.c.l.b16 %v273
        %v365 = vunpack.c.h.b16 %v273
        %v366 = vunpack.c.l.b16 %v274
        %v367 = vunpack.c.h.b16 %v274
        %v368 = vunpack.c.l.b16 %v275
        %v369 = vunpack.c.h.b16 %v275
        %v370 = vunpack.c.l.b16 %v276
        %v371 = vunpack.c.h.b16 %v276
        %v372 = vunpack.c.l.b16 %v277
        %v373 = vunpack.c.h.b16 %v277
        %v374 = vpack.c.b16 %v344, %v342
        %v375 = vpack.c.b16 %v345, %v343
        %v376 = vpack.c.b16 %v348, %v346
        %v377 = vpack.c.b16 %v349, %v347
        %v378 = vpack.c.b16 %v352, %v350
        %v379 = vpack.c.b16 %v353, %v351
        %v380 = vpack.c.b16 %v356, %v354
        %v381 = vpack.c.b16 %v357, %v355
        %v382 = vpack.c.b16 %v360, %v358
        %v383 = vpack.c.b16 %v361, %v359
        %v384 = vpack.c.b16 %v364, %v362
        %v385 = vpack.c.b16 %v365, %v363
        %v386 = vpack.c.b16 %v368, %v366
        %v387 = vpack.c.b16 %v369, %v367
        %v388 = vpack.c.b16 %v372, %v370
        %v389 = vpack.c.b16 %v373, %v371
        %406 = vmatprep.subr.bf16.mxu0 %v375
        %407 = vmatpush1.bf16.msra.mxu0 %v374
        %408 = vmatprep.subr.bf16.mxu0 %v377
        %409 = vmatpush1.bf16.msra.mxu0 %v376
        %410 = vmatprep.subr.bf16.mxu0 %v379
        %411 = vmatpush1.bf16.msra.mxu0 %v378
        %412 = vmatprep.subr.bf16.mxu0 %v381
        %413 = vmatpush1.bf16.msra.mxu0 %v380
        %414 = vmatprep.subr.bf16.mxu0 %v383
        %415 = vmatpush1.bf16.msra.mxu0 %v382
        %416 = vmatprep.subr.bf16.mxu0 %v385
        %417 = vmatpush1.bf16.msra.mxu0 %v384
        %418 = vmatprep.subr.bf16.mxu0 %v387
        %419 = vmatpush1.bf16.msra.mxu0 %v386
        %420 = vmatprep.subr.bf16.mxu0 %v389
        %421 = vmatpush1.bf16.msra.mxu0 %v388
        %422 = vmatprep.subr.bf16.mxu0 0
        %423 = vmatpush1.bf16.msra.mxu0 0
        %424 = vmatprep.subr.bf16.mxu0 0
        %425 = vmatpush1.bf16.msra.mxu0 0
        %426 = vmatprep.subr.bf16.mxu0 0
        %427 = vmatpush1.bf16.msra.mxu0 0
        %428 = vmatprep.subr.bf16.mxu0 0
        %429 = vmatpush1.bf16.msra.mxu0 0
        %430 = vmatprep.subr.bf16.mxu0 0
        %431 = vmatpush1.bf16.msra.mxu0 0
        %432 = vmatprep.subr.bf16.mxu0 0
        %433 = vmatpush1.bf16.msra.mxu0 0
        %434 = vmatprep.subr.bf16.mxu0 0
        %435 = vmatpush1.bf16.msra.mxu0 0
        %436 = vmatprep.subr.bf16.mxu0 0
        %437 = vmatpush1.bf16.msra.mxu0 0
        %438 = vmatprep.mubr.bf16.mxu0 0
        %439 = vmatmul.mubr.bf16.gmra.mrb[0].mxu0 %v310
        %v440 = vpop.f32.mrb[0].mxu0
        %v441 = vadd.f32 0.0, %v440
        %v442 = vpop.f32.mrb[0].mxu0
        %v443 = vadd.f32 0.0, %v442
        %v444 = vpop.f32.mrb[0].mxu0
        %v445 = vadd.f32 0.0, %v444
        %v446 = vpop.f32.mrb[0].mxu0
        %v447 = vadd.f32 0.0, %v446
        %448 = vmatprep.mubr.bf16.mxu0 0
        %449 = vmatmul.mubr.bf16.gmra.mrb[0].mxu0 %v311
        %v450 = vpop.f32.mrb[0].mxu0
        %v451 = vadd.f32 0.0, %v450
        %v452 = vpop.f32.mrb[0].mxu0
        %v453 = vadd.f32 0.0, %v452
        %v454 = vpop.f32.mrb[0].mxu0
        %v455 = vadd.f32 0.0, %v454
        %v456 = vpop.f32.mrb[0].mxu0
        %v457 = vadd.f32 0.0, %v456
        %458 = vmatprep.mubr.bf16.mxu0 0
        %459 = vmatmul.mubr.bf16.gmra.mrb[0].mxu0 %v312
        %v460 = vpop.f32.mrb[0].mxu0
        %v461 = vadd.f32 0.0, %v460
        %v462 = vpop.f32.mrb[0].mxu0
        %v463 = vadd.f32 0.0, %v462
        %v464 = vpop.f32.mrb[0].mxu0
        %v465 = vadd.f32 0.0, %v464
        %v466 = vpop.f32.mrb[0].mxu0
        %v467 = vadd.f32 0.0, %v466
        %468 = vmatprep.mubr.bf16.mxu0 0
        %469 = vmatmul.mubr.bf16.gmra.mrb[0].mxu0 %v313
        %v470 = vpop.f32.mrb[0].mxu0
        %v471 = vadd.f32 0.0, %v470
        %v472 = vpop.f32.mrb[0].mxu0
        %v473 = vadd.f32 0.0, %v472
        %v474 = vpop.f32.mrb[0].mxu0
        %v475 = vadd.f32 0.0, %v474
        %v476 = vpop.f32.mrb[0].mxu0
        %v477 = vadd.f32 0.0, %v476
        %478 = vmatprep.mubr.bf16.mxu0 0
        %479 = vmatmul.mubr.bf16.gmra.mrb[0].mxu0 %v314
        %v480 = vpop.f32.mrb[0].mxu0
        %v481 = vadd.f32 0.0, %v480
        %v482 = vpop.f32.mrb[0].mxu0
        %v483 = vadd.f32 0.0, %v482
        %v484 = vpop.f32.mrb[0].mxu0
        %v485 = vadd.f32 0.0, %v484
        %v486 = vpop.f32.mrb[0].mxu0
        %v487 = vadd.f32 0.0, %v486
        %488 = vmatprep.mubr.bf16.mxu0 0
        %489 = vmatmul.mubr.bf16.gmra.mrb[0].mxu0 %v315
        %v490 = vpop.f32.mrb[0].mxu0
        %v491 = vadd.f32 0.0, %v490
        %v492 = vpop.f32.mrb[0].mxu0
        %v493 = vadd.f32 0.0, %v492
        %v494 = vpop.f32.mrb[0].mxu0
        %v495 = vadd.f32 0.0, %v494
        %v496 = vpop.f32.mrb[0].mxu0
        %v497 = vadd.f32 0.0, %v496
        %498 = vmatprep.mubr.bf16.mxu0 0
        %499 = vmatmul.mubr.bf16.gmra.mrb[0].mxu0 %v316
        %v500 = vpop.f32.mrb[0].mxu0
        %v501 = vadd.f32 0.0, %v500
        %v502 = vpop.f32.mrb[0].mxu0
        %v503 = vadd.f32 0.0, %v502
        %v504 = vpop.f32.mrb[0].mxu0
        %v505 = vadd.f32 0.0, %v504
        %v506 = vpop.f32.mrb[0].mxu0
        %v507 = vadd.f32 0.0, %v506
        %508 = vmatprep.mubr.bf16.mxu0 0
        %509 = vmatmul.mubr.bf16.gmra.mrb[0].mxu0 %v317
        %v510 = vpop.f32.mrb[0].mxu0
        %v511 = vadd.f32 0.0, %v510
        %v512 = vpop.f32.mrb[0].mxu0
        %v513 = vadd.f32 0.0, %v512
        %v514 = vpop.f32.mrb[0].mxu0
        %v515 = vadd.f32 0.0, %v514
        %v516 = vpop.f32.mrb[0].mxu0
        %v517 = vadd.f32 0.0, %v516
        %518 = vdwg.mxu0
        %v519 = vpack.c.bf16 %v445, %v441
        %v520 = vpack.c.bf16 %v455, %v451
        %v521 = vpack.c.bf16 %v465, %v461
        %v522 = vpack.c.bf16 %v475, %v471
        %v523 = vpack.c.bf16 %v485, %v481
        %v524 = vpack.c.bf16 %v495, %v491
        %v525 = vpack.c.bf16 %v505, %v501
        %v526 = vpack.c.bf16 %v515, %v511
        %v535 = vunpack.c.l.b16 %v519
        %v536 = vunpack.c.h.b16 %v519
        %v537 = vunpack.c.l.b16 %v520
        %v538 = vunpack.c.h.b16 %v520
        %v539 = vunpack.c.l.b16 %v521
        %v540 = vunpack.c.h.b16 %v521
        %v541 = vunpack.c.l.b16 %v522
        %v542 = vunpack.c.h.b16 %v522
        %v543 = vunpack.c.l.b16 %v523
        %v544 = vunpack.c.h.b16 %v523
        %v545 = vunpack.c.l.b16 %v524
        %v546 = vunpack.c.h.b16 %v524
        %v547 = vunpack.c.l.b16 %v525
        %v548 = vunpack.c.h.b16 %v525
        %v549 = vunpack.c.l.b16 %v526
        %v550 = vunpack.c.h.b16 %v526
        %v551 = vpack.c.b16 %v535, %v535
        %v552 = vpack.c.b16 %v536, %v536
        %v553 = vpack.c.b16 %v537, %v537
        %v554 = vpack.c.b16 %v538, %v538
        %v555 = vpack.c.b16 %v539, %v539
        %v556 = vpack.c.b16 %v540, %v540
        %v557 = vpack.c.b16 %v541, %v541
        %v558 = vpack.c.b16 %v542, %v542
        %v559 = vpack.c.b16 %v543, %v543
        %v560 = vpack.c.b16 %v544, %v544
        %v561 = vpack.c.b16 %v545, %v545
        %v562 = vpack.c.b16 %v546, %v546
        %v563 = vpack.c.b16 %v547, %v547
        %v564 = vpack.c.b16 %v548, %v548
        %v565 = vpack.c.b16 %v549, %v549
        %v566 = vpack.c.b16 %v550, %v550
        %583 = vst [vmem:[%s234] sm:$0xf] %v551
        %584 = vst [vmem:[%s234 + $0x4] sm:$0xf] %v552
        %585 = vst [vmem:[%s234 + $0x8] sm:$0xf] %v553
        %586 = vst [vmem:[%s234 + $0xc] sm:$0xf] %v554
        %587 = vst [vmem:[%s234 + $0x10] sm:$0xf] %v555
        %588 = vst [vmem:[%s234 + $0x14] sm:$0xf] %v556
        %589 = vst [vmem:[%s234 + $0x18] sm:$0xf] %v557
        %590 = vst [vmem:[%s234 + $0x1c] sm:$0xf] %v558
        %591 = vst [vmem:[%s234 + $0x20] sm:$0xf] %v559
        %592 = vst [vmem:[%s234 + $0x24] sm:$0xf] %v560
        %593 = vst [vmem:[%s234 + $0x28] sm:$0xf] %v561
        %594 = vst [vmem:[%s234 + $0x2c] sm:$0xf] %v562
        %595 = vst [vmem:[%s234 + $0x30] sm:$0xf] %v563
        %596 = vst [vmem:[%s234 + $0x34] sm:$0xf] %v564
        %597 = vst [vmem:[%s234 + $0x38] sm:$0xf] %v565
        %598 = vst [vmem:[%s234 + $0x3c] sm:$0xf] %v566
        %v599 = vld [vmem:[%s2] sm:$0x1]
        %v601 = vlaneseq
        %v602 = vshrl.u32 %v601, 7
        %v603 = vsub.s32 0, %v602
        %v604 = vrot.slane %v599, %v603
        %v606 = vadd.f32 %v443, %v604
        %v607 = vadd.f32 %v447, %v604
        %v608 = vadd.f32 %v453, %v604
        %v609 = vadd.f32 %v457, %v604
        %v610 = vadd.f32 %v463, %v604
        %v611 = vadd.f32 %v467, %v604
        %v612 = vadd.f32 %v473, %v604
        %v613 = vadd.f32 %v477, %v604
        %v614 = vadd.f32 %v483, %v604
        %v615 = vadd.f32 %v487, %v604
        %v616 = vadd.f32 %v493, %v604
        %v617 = vadd.f32 %v497, %v604
        %v618 = vadd.f32 %v503, %v604
        %v619 = vadd.f32 %v507, %v604
        %v620 = vadd.f32 %v513, %v604
        %v621 = vadd.f32 %v517, %v604
        %622 = vst [vmem:[%s241] sm:$0xff] %v606
        %623 = vst [vmem:[%s241 + $0x8] sm:$0xff] %v607
        %624 = vst [vmem:[%s241 + $0x10] sm:$0xff] %v608
        %625 = vst [vmem:[%s241 + $0x18] sm:$0xff] %v609
        %626 = vst [vmem:[%s241 + $0x20] sm:$0xff] %v610
        %627 = vst [vmem:[%s241 + $0x28] sm:$0xff] %v611
        %628 = vst [vmem:[%s241 + $0x30] sm:$0xff] %v612
        %629 = vst [vmem:[%s241 + $0x38] sm:$0xff] %v613
        %630 = vst [vmem:[%s241 + $0x40] sm:$0xff] %v614
        %631 = vst [vmem:[%s241 + $0x48] sm:$0xff] %v615
        %632 = vst [vmem:[%s241 + $0x50] sm:$0xff] %v616
        %633 = vst [vmem:[%s241 + $0x58] sm:$0xff] %v617
        %634 = vst [vmem:[%s241 + $0x60] sm:$0xff] %v618
        %635 = vst [vmem:[%s241 + $0x68] sm:$0xff] %v619
        %636 = vst [vmem:[%s241 + $0x70] sm:$0xff] %v620
        %637 = vst [vmem:[%s241 + $0x78] sm:$0xff] %v621
        %s638 = sand.u32 %s102, 1
        %s639 = scalar_lea.sflag [#allocation4], %s638
        %s640 = sand.u32 %s102, 1
        %s641 = smul.addr %s640, 64
        %s642 = scalar_lea.vmem [#allocation7], %s641
        %s643 = sand.u32 %s128, 1
        %s644 = scalar_lea.sflag [#allocation9], %s643
        %s645 = sand.u32 %s128, 1
        %s646 = smul.addr %s645, 128
        %s647 = scalar_lea.vmem [#allocation8], %s646
        // Predicated region
        $region41: #{tpu_custom_call.1} parent=31 // pred_check
          %p648 = pneg %p112
        $region42: #{tpu_custom_call.1} parent=31 // pred_check_branch
          %650 = sbr.rel (%p648) target = $region44
        $region43: #{tpu_custom_call.1} parent=31 // pred_region
          %s651 = smul.u32 16, %s26
          %s653 = ssub.s32 1024, 1024
          %654 = vsyncadd %s639, %s653
          %s655 = smul.addr %s651, 64
          %s656 = scalar_lea.hbm %s3, %s655
          %s657 = sshll.u32 %s642, 4
          %s658 = int_to_ptr.vmem [resolvable:$true] %s657
          %663 = dma.vmem_to_hbm [thread:$0]  %s658, 1024, %s656, %s639, 64, 64, 4
        $region44: #{tpu_custom_call.1} parent=31 // pred_fallthru
          _
        // Predicated region
        $region45: #{tpu_custom_call.1} parent=31 // pred_check
          %p664 = pneg %p138
        $region46: #{tpu_custom_call.1} parent=31 // pred_check_branch
          %666 = sbr.rel (%p664) target = $region48
        $region47: #{tpu_custom_call.1} parent=31 // pred_region
          %s667 = smul.u32 16, %s26
          %s669 = ssub.s32 2048, 2048
          %670 = vsyncadd %s644, %s669
          %s671 = smul.addr %s667, 128
          %s672 = scalar_lea.hbm %s4, %s671
          %s673 = sshll.u32 %s647, 4
          %s674 = int_to_ptr.vmem [resolvable:$true] %s673
          %679 = dma.vmem_to_hbm [thread:$0]  %s674, 2048, %s672, %s644, 128, 128, 8
        $region48: #{tpu_custom_call.1} parent=31 // pred_fallthru
          _
      $region32: #{tpu_custom_call.1} parent=5 // pred_fallthru
        _
      %p680 = scmp.le.s32.totalorder 2, %s21
      // Predicated region
      $region49: #{tpu_custom_call.1} parent=5 // pred_check
        %p681 = pneg %p680
      $region50: #{tpu_custom_call.1} parent=5 // pred_check_branch
        %683 = sbr.rel (%p681) target = $region52
      $region51: #{tpu_custom_call.1} parent=5 // pred_region
        %s684 = ssub.s32 %s21, 2
        // Predicated region
        $region53: #{tpu_custom_call.1} parent=51 // pred_check
          %p685 = pneg %p118
        $region54: #{tpu_custom_call.1} parent=51 // pred_check_branch
          %687 = sbr.rel (%p685) target = $region56
        $region55: #{tpu_custom_call.1} parent=51 // pred_region
          %s688 = sand.u32 %s103, 1
          %s689 = scalar_lea.sflag [#allocation4], %s688
          %s690 = sand.u32 %s103, 1
          %s691 = smul.addr %s690, 64
          %s692 = scalar_lea.vmem [#allocation7], %s691
          %693 = dma.done %s689, 1024
        $region56: #{tpu_custom_call.1} parent=51 // pred_fallthru
          _
        // Predicated region
        $region57: #{tpu_custom_call.1} parent=51 // pred_check
          %p694 = pneg %p144
        $region58: #{tpu_custom_call.1} parent=51 // pred_check_branch
          %696 = sbr.rel (%p694) target = $region60
        $region59: #{tpu_custom_call.1} parent=51 // pred_region
          %s697 = sand.u32 %s129, 1
          %s698 = scalar_lea.sflag [#allocation9], %s697
          %s699 = sand.u32 %s129, 1
          %s700 = smul.addr %s699, 128
          %s701 = scalar_lea.vmem [#allocation8], %s700
          %702 = dma.done %s698, 2048
        $region60: #{tpu_custom_call.1} parent=51 // pred_fallthru
          _
      $region52: #{tpu_custom_call.1} parent=5 // pred_fallthru
        _
    $region6: #{tpu_custom_call.1} parent=1 // loop_footer
      %s25 = sadd.s32 1, %s21
    $region7: #{tpu_custom_call.1} parent=1 // loop_footer_branch
      %20 = sbr.rel target = $region3
    $region8: #{tpu_custom_call.1} parent=1 // loop_exit
      _
    %703 = vsyncpa [#allocation3], 1
    %s704 = scalar_lea.sflag [#allocation3], 1
    %705 = vsyncpa %s704, 1
    %706 = vsyncpa [#allocation6], 1
    %707 = vsyncpa [#allocation4], 1
    %s708 = scalar_lea.sflag [#allocation4], 1
    %709 = vsyncpa %s708, 1
    %710 = vsyncpa [#allocation9], 1
    %s711 = scalar_lea.sflag [#allocation9], 1
    %712 = vsyncpa %s711, 1

</llo_original>
